<compile_context>
chip_gen: v5e
topology: v5e:2x2
jax: 0.10.0
libtpu: 0.0.40
codegen_flags: <defaults>
</compile_context>

<pallas_src>
import functools

import jax
import jax.numpy as jnp
from jax.experimental import pallas as pl
from jax.experimental.pallas import tpu as pltpu


def _round_up(x, m):
    return (x + m - 1) // m * m


# ---------------------------------------------------------------------------
# Kernel: one batch tile per grid step, whole network fused.
# ---------------------------------------------------------------------------
def actor_critic_kernel(x_ref, w1_ref, w2_ref, wh_ref, b_ref, out_ref,
                        *, fc1_pad, fc2_pad, head_pad, compute_dtype):
    # MXU operands in compute_dtype (f32 or bf16); accumulation & epilogues f32.
    x = x_ref[...].astype(compute_dtype)              # [TB, input_dim]

    b1 = b_ref[0:1, :fc1_pad]                          # [1, fc1_pad] f32
    b2 = b_ref[1:2, :fc2_pad]                          # [1, fc2_pad] f32
    bh = b_ref[2:3, :head_pad]                         # [1, head_pad] f32

    # fc1 + ReLU (lane-dense: fc1 padded to 128 lanes)
    h1 = jnp.dot(x, w1_ref[...], preferred_element_type=jnp.float32) + b1
    h1 = jnp.maximum(h1, 0.0)

    # fc2 + ReLU
    h2 = jnp.dot(h1.astype(compute_dtype), w2_ref[...],
                 preferred_element_type=jnp.float32) + b2
    h2 = jnp.maximum(h2, 0.0)

    # fused PI/V head -> single lane-dense [TB, head_pad] store
    out_ref[...] = (jnp.dot(h2.astype(compute_dtype), wh_ref[...],
                            preferred_element_type=jnp.float32)
                    + bh).astype(out_ref.dtype)


# ---------------------------------------------------------------------------
# One-time parameter layout conversion (NOT on the hot path).
# ---------------------------------------------------------------------------
def prepare_params(params, weight_dtype=jnp.float32):
    """Convert PyTorch-convention weights ([out, in]) to kernel layout once.

    weight_dtype=jnp.bfloat16 narrows only the MXU operands (recommended on
    v6e/v7x); biases/accumulation/epilogues stay f32.
    """
    fc1_dim = int(params["fc1_w"].shape[0])
    fc2_dim = int(params["fc2_w"].shape[0])
    n_action = int(params["PI_w"].shape[0])
    head_dim = n_action + 1                          # PI columns + V column

    fc1_pad = _round_up(fc1_dim, 128)                # lane-dense intermediates
    fc2_pad = _round_up(fc2_dim, 128)
    head_pad = _round_up(head_dim, 128)              # lane-dense output width
    bias_width = max(fc1_pad, fc2_pad, head_pad)

    def _pad2(w, rows, cols):
        return jnp.pad(w, ((0, rows - w.shape[0]), (0, cols - w.shape[1])))

    input_dim = int(params["fc1_w"].shape[1])
    w1 = _pad2(params["fc1_w"].T, input_dim, fc1_pad).astype(weight_dtype)
    w2 = _pad2(params["fc2_w"].T, fc1_pad, fc2_pad).astype(weight_dtype)
    wh = jnp.concatenate([params["PI_w"].T, params["V_w"].T], axis=1)
    wh = _pad2(wh, fc2_pad, head_pad).astype(weight_dtype)

    def _pad_row(b):
        return jnp.pad(b, (0, bias_width - b.shape[0]))[None, :]

    bh = jnp.concatenate([params["PI_b"], params["V_b"]])
    b_all = jnp.concatenate(
        [_pad_row(params["fc1_b"]), _pad_row(params["fc2_b"]), _pad_row(bh)],
        axis=0).astype(jnp.float32)                  # [3, bias_width] f32

    arrays = {"w1": w1, "w2": w2, "wh": wh, "b": b_all}
    meta = {"n_action": n_action}
    return arrays, meta


# ---------------------------------------------------------------------------
# Tile / spec helpers.
# ---------------------------------------------------------------------------
def _pick_tile_b(B):
    """Batch tile: big enough to amortize ~0.35us/step overhead, small enough
    to give ~4 grid steps on large batches (>=2 per v7x TensorCore)."""
    CAP = 4096          # state+out tiles at TB=4096 are only ~2.3 MiB
    MIN_SPLIT = 128     # don't bother splitting batches smaller than this
    target = _round_up(max(1, -(-B // 4)), 8)        # aim for ~4 grid steps
    tile = max(MIN_SPLIT, min(target, CAP))
    return min(tile, _round_up(B, 8))


def _maybe_buffered_spec(block_shape, index_map, depth):
    """BlockSpec with N-deep pipelining when supported; default otherwise."""
    if depth <= 2:
        return pl.BlockSpec(block_shape, index_map)
    try:
        return pl.BlockSpec(block_shape, index_map,
                            pipeline_mode=pl.Buffered(depth))
    except (AttributeError, TypeError):
        return pl.BlockSpec(block_shape, index_map)


# ---------------------------------------------------------------------------
# Jitted forward.
# ---------------------------------------------------------------------------
@functools.partial(jax.jit, static_argnames=("n_action",))
def _forward_impl(state, w1, w2, wh, b_all, *, n_action):
    B, input_dim = state.shape
    fc1_pad = w1.shape[1]
    fc2_pad = w2.shape[1]
    head_pad = wh.shape[1]
    compute_dtype = w1.dtype

    tile_b = _pick_tile_b(B)
    grid = (pl.cdiv(B, tile_b),)                     # partial last block is OK
    depth = 3 if grid[0] >= 3 else 2                 # deeper buffering only
                                                     # when it can help

    kernel = functools.partial(
        actor_critic_kernel, fc1_pad=fc1_pad, fc2_pad=fc2_pad,
        head_pad=head_pad, compute_dtype=compute_dtype)

    out = pl.pallas_call(
        kernel,
        out_shape=jax.ShapeDtypeStruct((B, head_pad), jnp.float32),
        grid=grid,
        in_specs=[
            _maybe_buffered_spec((tile_b, input_dim), lambda i: (i, 0), depth),
            pl.BlockSpec(w1.shape, lambda i: (0, 0)),    # weights: VMEM-resident
            pl.BlockSpec(w2.shape, lambda i: (0, 0)),
            pl.BlockSpec(wh.shape, lambda i: (0, 0)),
            pl.BlockSpec(b_all.shape, lambda i: (0, 0)),
        ],
        out_specs=_maybe_buffered_spec((tile_b, head_pad),
                                       lambda i: (i, 0), depth),
        compiler_params=pltpu.CompilerParams(
            dimension_semantics=("parallel",)),       # megacore batch split
    )(state, w1, w2, wh, b_all)

    pi = out[:, :n_action]
    v = out[:, n_action:n_action + 1]
    return pi, v


def actor_critic_forward(state, prepared):
    """state: [B, input_dim] float32. prepared: output of prepare_params()."""
    arrays, meta = prepared
    return _forward_impl(state, arrays["w1"], arrays["w2"], arrays["wh"],
                         arrays["b"], n_action=meta["n_action"])


# ---------------------------------------------------------------------------
# Init mimicking nn.Linear's uniform(-1/sqrt(fan_in), 1/sqrt(fan_in)).
# ---------------------------------------------------------------------------
def init_params(key, input_dim, fc1_dim, fc2_dim, n_action):
    def linear(k, out_d, in_d):
        k_w, k_b = jax.random.split(k)
        bound = 1.0 / jnp.sqrt(jnp.float32(in_d))
        w = jax.random.uniform(k_w, (out_d, in_d), jnp.float32, -bound, bound)
        b = jax.random.uniform(k_b, (out_d,), jnp.float32, -bound, bound)
        return w, b

    k1, k2, k3, k4 = jax.random.split(key, 4)
    fc1_w, fc1_b = linear(k1, fc1_dim, input_dim)
    fc2_w, fc2_b = linear(k2, fc2_dim, fc1_dim)
    pi_w, pi_b = linear(k3, n_action, fc2_dim)
    v_w, v_b = linear(k4, 1, fc2_dim)
    return {
        "fc1_w": fc1_w, "fc1_b": fc1_b,
        "fc2_w": fc2_w, "fc2_b": fc2_b,
        "PI_w": pi_w, "PI_b": pi_b,
        "V_w": v_w, "V_b": v_b,
    }


if __name__ == "__main__":
    # Small shapes implied by the module: input_dim=16, fc1=32, fc2=32, n_action=4
    batch, input_dim, fc1_dim, fc2_dim, n_action = 8, 16, 32, 32, 4

    key = jax.random.PRNGKey(0)
    k_params, k_state, k_state2 = jax.random.split(key, 3)
    params = init_params(k_params, input_dim, fc1_dim, fc2_dim, n_action)
    state = jax.random.normal(k_state, (batch, input_dim), jnp.float32)

    def reference(s):
        h1 = jnp.maximum(s @ params["fc1_w"].T + params["fc1_b"], 0.0)
        h2 = jnp.maximum(h1 @ params["fc2_w"].T + params["fc2_b"], 0.0)
        return (h2 @ params["PI_w"].T + params["PI_b"],
                h2 @ params["V_w"].T + params["V_b"])

    # ---- exact f32 path --------------------------------------------------
    prepared = prepare_params(params)            # one-time layout conversion
    pi, v = actor_critic_forward(state, prepared)
    jax.block_until_ready((pi, v))
    pi_ref, v_ref = reference(state)
    assert pi.shape == (batch, n_action) and v.shape == (batch, 1)
    assert jnp.allclose(pi, pi_ref, atol=1e-5), "PI mismatch (f32)"
    assert jnp.allclose(v, v_ref, atol=1e-5), "V mismatch (f32)"

    # ---- multi-tile path with a partial last block (no wrapper pad) ------
    state2 = jax.random.normal(k_state2, (300, input_dim), jnp.float32)
    pi2, v2 = actor_critic_forward(state2, prepared)
    jax.block_until_ready((pi2, v2))
    pi2_ref, v2_ref = reference(state2)
    assert jnp.allclose(pi2, pi2_ref, atol=1e-5), "PI mismatch (multi-tile)"
    assert jnp.allclose(v2, v2_ref, atol=1e-5), "V mismatch (multi-tile)"

    # ---- bf16 MXU-operand path (recommended on v6e/v7x) ------------------
    prepared_bf16 = prepare_params(params, weight_dtype=jnp.bfloat16)
    pi_b, v_b = actor_critic_forward(state, prepared_bf16)
    jax.block_until_ready((pi_b, v_b))
    assert jnp.allclose(pi_b, pi_ref, atol=5e-2, rtol=5e-2), "PI mismatch (bf16)"
    assert jnp.allclose(v_b, v_ref, atol=5e-2, rtol=5e-2), "V mismatch (bf16)"

    print("KERNEL_OK")
</pallas_src>

<mosaic_0001>
module attributes {stable_mosaic.version = 11 : i64} {
  func.func @actor_critic_kernel(%arg0: i32, %arg1: memref<8x16xf32, #tpu.memory_space<vmem>>, %arg2: memref<16x128xf32, #tpu.memory_space<vmem>>, %arg3: memref<128x128xf32, #tpu.memory_space<vmem>>, %arg4: memref<128x128xf32, #tpu.memory_space<vmem>>, %arg5: memref<3x128xf32, #tpu.memory_space<vmem>>, %arg6: memref<8x128xf32, #tpu.memory_space<vmem>>) attributes {dimension_semantics = [#tpu.dimension_semantics<parallel>], iteration_bounds = array<i64: 1>, scalar_prefetch = 0 : i64, scratch_operands = 0 : i64, tpu.core_type = #tpu.core_type<tc>, window_params = [{transform_indices = @transform_0, window_bounds = array<i64: 8, 16>}, {pipeline_mode = #tpu.pipeline_mode<synchronous>, transform_indices = @transform_1, window_bounds = array<i64: 16, 128>}, {pipeline_mode = #tpu.pipeline_mode<synchronous>, transform_indices = @transform_2, window_bounds = array<i64: 128, 128>}, {pipeline_mode = #tpu.pipeline_mode<synchronous>, transform_indices = @transform_3, window_bounds = array<i64: 128, 128>}, {pipeline_mode = #tpu.pipeline_mode<synchronous>, transform_indices = @transform_4, window_bounds = array<i64: 3, 128>}, {transform_indices = @transform_5, window_bounds = array<i64: 8, 128>}]} {
    %c0 = arith.constant 0 : index
    %c0_0 = arith.constant 0 : index
    %0 = vector.load %arg1[%c0, %c0_0] : memref<8x16xf32, #tpu.memory_space<vmem>>, vector<8x16xf32>
    %c0_1 = arith.constant 0 : index
    %c0_2 = arith.constant 0 : index
    %1 = vector.load %arg5[%c0_1, %c0_2] : memref<3x128xf32, #tpu.memory_space<vmem>>, vector<1x128xf32>
    %c1 = arith.constant 1 : index
    %c0_3 = arith.constant 0 : index
    %2 = vector.load %arg5[%c1, %c0_3] : memref<3x128xf32, #tpu.memory_space<vmem>>, vector<1x128xf32>
    %c2 = arith.constant 2 : index
    %c0_4 = arith.constant 0 : index
    %3 = vector.load %arg5[%c2, %c0_4] : memref<3x128xf32, #tpu.memory_space<vmem>>, vector<1x128xf32>
    %c0_5 = arith.constant 0 : index
    %c0_6 = arith.constant 0 : index
    %4 = vector.load %arg2[%c0_5, %c0_6] : memref<16x128xf32, #tpu.memory_space<vmem>>, vector<16x128xf32>
    %cst = arith.constant dense<0.000000e+00> : vector<8x128xf32>
    %5 = tpu.matmul %0, %4, %cst {dimension_numbers = #tpu.dot_dimension_numbers<[1], [0], [0], [1], [0, 0, 1, 1], [], []>} : vector<8x16xf32>, vector<16x128xf32>, vector<8x128xf32> -> vector<8x128xf32>
    %6 = vector.broadcast %1 : vector<1x128xf32> to vector<8x128xf32>
    %7 = arith.addf %5, %6 : vector<8x128xf32>
    %cst_7 = arith.constant 0.000000e+00 : f32
    %8 = vector.broadcast %cst_7 : f32 to vector<8x128xf32>
    %9 = arith.maximumf %7, %8 : vector<8x128xf32>
    %c0_8 = arith.constant 0 : index
    %c0_9 = arith.constant 0 : index
    %10 = vector.load %arg3[%c0_8, %c0_9] : memref<128x128xf32, #tpu.memory_space<vmem>>, vector<128x128xf32>
    %cst_10 = arith.constant dense<0.000000e+00> : vector<8x128xf32>
    %11 = tpu.matmul %9, %10, %cst_10 {dimension_numbers = #tpu.dot_dimension_numbers<[1], [0], [0], [1], [0, 0, 1, 1], [], []>} : vector<8x128xf32>, vector<128x128xf32>, vector<8x128xf32> -> vector<8x128xf32>
    %12 = vector.broadcast %2 : vector<1x128xf32> to vector<8x128xf32>
    %13 = arith.addf %11, %12 : vector<8x128xf32>
    %cst_11 = arith.constant 0.000000e+00 : f32
    %14 = vector.broadcast %cst_11 : f32 to vector<8x128xf32>
    %15 = arith.maximumf %13, %14 : vector<8x128xf32>
    %c0_12 = arith.constant 0 : index
    %c0_13 = arith.constant 0 : index
    %16 = vector.load %arg4[%c0_12, %c0_13] : memref<128x128xf32, #tpu.memory_space<vmem>>, vector<128x128xf32>
    %cst_14 = arith.constant dense<0.000000e+00> : vector<8x128xf32>
    %17 = tpu.matmul %15, %16, %cst_14 {dimension_numbers = #tpu.dot_dimension_numbers<[1], [0], [0], [1], [0, 0, 1, 1], [], []>} : vector<8x128xf32>, vector<128x128xf32>, vector<8x128xf32> -> vector<8x128xf32>
    %18 = vector.broadcast %3 : vector<1x128xf32> to vector<8x128xf32>
    %19 = arith.addf %17, %18 : vector<8x128xf32>
    %c0_15 = arith.constant 0 : index
    %c0_16 = arith.constant 0 : index
    %20 = vector.load %arg6[%c0_15, %c0_16] : memref<8x128xf32, #tpu.memory_space<vmem>>, vector<8x128xf32>
    tpu.vector_store %arg6[%c0_15, %c0_16], %19 {strides = array<i32>} : memref<8x128xf32, #tpu.memory_space<vmem>>, vector<8x128xf32>,
    return
  }
  func.func @transform_0(%arg0: i32) -> (i32, i32) {
    %c0_i32 = arith.constant 0 : i32
    %c0_i32_0 = arith.constant 0 : i32
    return %arg0, %c0_i32 : i32, i32
  }
  func.func @transform_1(%arg0: i32) -> (i32, i32) {
    %c0_i32 = arith.constant 0 : i32
    %c0_i32_0 = arith.constant 0 : i32
    %c0_i32_1 = arith.constant 0 : i32
    return %c0_i32, %c0_i32_0 : i32, i32
  }
  func.func @transform_2(%arg0: i32) -> (i32, i32) {
    %c0_i32 = arith.constant 0 : i32
    %c0_i32_0 = arith.constant 0 : i32
    %c0_i32_1 = arith.constant 0 : i32
    return %c0_i32, %c0_i32_0 : i32, i32
  }
  func.func @transform_3(%arg0: i32) -> (i32, i32) {
    %c0_i32 = arith.constant 0 : i32
    %c0_i32_0 = arith.constant 0 : i32
    %c0_i32_1 = arith.constant 0 : i32
    return %c0_i32, %c0_i32_0 : i32, i32
  }
  func.func @transform_4(%arg0: i32) -> (i32, i32) {
    %c0_i32 = arith.constant 0 : i32
    %c0_i32_0 = arith.constant 0 : i32
    %c0_i32_1 = arith.constant 0 : i32
    return %c0_i32, %c0_i32_0 : i32, i32
  }
  func.func @transform_5(%arg0: i32) -> (i32, i32) {
    %c0_i32 = arith.constant 0 : i32
    %c0_i32_0 = arith.constant 0 : i32
    return %arg0, %c0_i32 : i32, i32
  }
}

</mosaic_0001>

<llo_original>
// kernel: _forward_impl.1
$region0: #{_forward_impl.1}
  #allocation0 [shape = 'u32[]', space=smem, size = 0x4, offset = 0x4, fixed_abs, tag = 'smem constant byte address 0x4 - core index']
  #allocation1 [shape = 'u32[72,128]{1,0:T(1,128)}', space=vmem, size = 0x9000, scoped, tag = 'internal scratch']
  %s0 = inlined_call_operand.hbm [shape: f32[8,16], index: 0, kind: input, shape index: {}]
  %s1 = inlined_call_operand.hbm [shape: f32[16,128], index: 1, kind: input, shape index: {}]
  %s2 = inlined_call_operand.hbm [shape: f32[128,128], index: 2, kind: input, shape index: {}]
  %s3 = inlined_call_operand.hbm [shape: f32[128,128], index: 3, kind: input, shape index: {}]
  %s4 = inlined_call_operand.hbm [shape: f32[3,128], index: 4, kind: input, shape index: {}]
  %s5 = inlined_call_operand.vmem [shape: f32[8,128], index: 5, kind: output, shape index: {}]
  %s6 = sld [smem:[#allocation0]]
  $region50: #{_forward_impl.1} parent=0
    _
  %s8 = ssub.s32 1, %s6
  %s9 = scalar_select 0, %s8, %s6
  $region1: #{_forward_impl.1} parent=0
    #allocation2 [shape = 'u8[4096]{0}', space=vmem, size = 0x1000, scoped, tag = 'input window, operand 0, single buffered']
    #allocation3 [shape = 's32[1]{0}', space=sflag, size = 0x4, scoped, tag = 'scoped memory for _forward_impl.1']
    #allocation4 [shape = 'u8[8192]{0}', space=vmem, size = 0x2000, scoped, tag = 'input window, operand 1, single buffered']
    #allocation5 [shape = 's32[1]{0}', space=sflag, size = 0x4, scoped, tag = 'scoped memory for _forward_impl.1']
    #allocation6 [shape = 'u8[65536]{0}', space=vmem, size = 0x10000, scoped, tag = 'input window, operand 2, single buffered']
    #allocation7 [shape = 'u8[65536]{0}', space=vmem, size = 0x10000, scoped, tag = 'input window, operand 3, single buffered']
    #allocation8 [shape = 's32[1]{0}', space=sflag, size = 0x4, scoped, tag = 'scoped memory for _forward_impl.1']
    #allocation9 [shape = 'u8[2048]{0}', space=vmem, size = 0x800, scoped, tag = 'input window, operand 4, single buffered']
    %10 = vsyncpa [#allocation3], 0
    %11 = vsyncpa [#allocation5], 0
    %12 = vsyncpa [#allocation8], 0
    // Predicated region
    $region2: #{_forward_impl.1} parent=1 // pred_check
      _
    $region3: #{_forward_impl.1} parent=1 // pred_check_branch
      %14 = sbr.rel (0) target = $region5
    $region4: #{_forward_impl.1} parent=1 // pred_region
      %16 = vsyncadd [#allocation3], 0
      %s18 = sshll.u32 %s0, 4
      %s19 = int_to_ptr.hbm [resolvable:$true] %s18
      %s20 = sshll.u32 [#allocation2], 4
      %s21 = int_to_ptr.vmem [resolvable:$true] %s20
      %23 = dma.hbm_to_vmem [thread:$0]  %s19, 128, %s21, [#allocation3]
    $region5: #{_forward_impl.1} parent=1 // pred_fallthru
      _
    // Predicated region
    $region6: #{_forward_impl.1} parent=1 // pred_check
      _
    $region7: #{_forward_impl.1} parent=1 // pred_check_branch
      %25 = sbr.rel (0) target = $region9
    $region8: #{_forward_impl.1} parent=1 // pred_region
      %27 = vsyncadd [#allocation5], 0
      %s28 = sshll.u32 %s1, 4
      %s29 = int_to_ptr.hbm [resolvable:$true] %s28
      %s30 = sshll.u32 [#allocation4], 4
      %s31 = int_to_ptr.vmem [resolvable:$true] %s30
      %36 = dma.hbm_to_vmem [thread:$0]  %s29, 256, %s31, [#allocation5], 128, 128, 8
    $region9: #{_forward_impl.1} parent=1 // pred_fallthru
      _
    // Predicated region
    $region10: #{_forward_impl.1} parent=1 // pred_check
      _
    $region11: #{_forward_impl.1} parent=1 // pred_check_branch
      %38 = sbr.rel (0) target = $region13
    $region12: #{_forward_impl.1} parent=1 // pred_region
      %40 = vsyncadd [#allocation5], 0
      %s41 = sshll.u32 %s2, 4
      %s42 = int_to_ptr.hbm [resolvable:$true] %s41
      %s43 = sshll.u32 [#allocation6], 4
      %s44 = int_to_ptr.vmem [resolvable:$true] %s43
      %49 = dma.hbm_to_vmem [thread:$0]  %s42, 2048, %s44, [#allocation5], 128, 128, 8
    $region13: #{_forward_impl.1} parent=1 // pred_fallthru
      _
    // Predicated region
    $region14: #{_forward_impl.1} parent=1 // pred_check
      _
    $region15: #{_forward_impl.1} parent=1 // pred_check_branch
      %51 = sbr.rel (0) target = $region17
    $region16: #{_forward_impl.1} parent=1 // pred_region
      %53 = vsyncadd [#allocation8], 0
      %s54 = sshll.u32 %s3, 4
      %s55 = int_to_ptr.hbm [resolvable:$true] %s54
      %s56 = sshll.u32 [#allocation7], 4
      %s57 = int_to_ptr.vmem [resolvable:$true] %s56
      %62 = dma.hbm_to_vmem [thread:$0]  %s55, 2048, %s57, [#allocation8], 128, 128, 8
    $region17: #{_forward_impl.1} parent=1 // pred_fallthru
      _
    // Predicated region
    $region18: #{_forward_impl.1} parent=1 // pred_check
      _
    $region19: #{_forward_impl.1} parent=1 // pred_check_branch
      %64 = sbr.rel (0) target = $region21
    $region20: #{_forward_impl.1} parent=1 // pred_region
      %66 = vsyncadd [#allocation8], 0
      %s68 = sshll.u32 %s4, 4
      %s69 = int_to_ptr.hbm [resolvable:$true] %s68
      %s70 = sshll.u32 [#allocation9], 4
      %s71 = int_to_ptr.vmem [resolvable:$true] %s70
      %73 = dma.hbm_to_vmem [thread:$0]  %s69, 64, %s71, [#allocation8]
    $region21: #{_forward_impl.1} parent=1 // pred_fallthru
      _
    // Predicated region
    $region22: #{_forward_impl.1} parent=1 // pred_check
      _
    $region23: #{_forward_impl.1} parent=1 // pred_check_branch
      %75 = sbr.rel (0) target = $region25
    $region24: #{_forward_impl.1} parent=1 // pred_region
      %77 = dma.done [#allocation3], 128
    $region25: #{_forward_impl.1} parent=1 // pred_fallthru
      _
    // Predicated region
    $region26: #{_forward_impl.1} parent=1 // pred_check
      _
    $region27: #{_forward_impl.1} parent=1 // pred_check_branch
      %79 = sbr.rel (0) target = $region29
    $region28: #{_forward_impl.1} parent=1 // pred_region
      %81 = dma.done [#allocation5], 256
    $region29: #{_forward_impl.1} parent=1 // pred_fallthru
      _
    // Predicated region
    $region30: #{_forward_impl.1} parent=1 // pred_check
      _
    $region31: #{_forward_impl.1} parent=1 // pred_check_branch
      %83 = sbr.rel (0) target = $region33
    $region32: #{_forward_impl.1} parent=1 // pred_region
      %85 = dma.done [#allocation5], 2048
    $region33: #{_forward_impl.1} parent=1 // pred_fallthru
      _
    // Predicated region
    $region34: #{_forward_impl.1} parent=1 // pred_check
      _
    $region35: #{_forward_impl.1} parent=1 // pred_check_branch
      %87 = sbr.rel (0) target = $region37
    $region36: #{_forward_impl.1} parent=1 // pred_region
      %89 = dma.done [#allocation8], 2048
    $region37: #{_forward_impl.1} parent=1 // pred_fallthru
      _
    // Predicated region
    $region38: #{_forward_impl.1} parent=1 // pred_check
      _
    $region39: #{_forward_impl.1} parent=1 // pred_check_branch
      %91 = sbr.rel (0) target = $region41
    $region40: #{_forward_impl.1} parent=1 // pred_region
      %93 = dma.done [#allocation8], 64
    $region41: #{_forward_impl.1} parent=1 // pred_fallthru
      _
    %v94 = vld [vmem:[#allocation2] sm:$0xff]
    %v95 = vld [vmem:[#allocation9] sm:$0x1]
    %v96 = vld [vmem:[#allocation9 + $0x1] sm:$0x1]
    %v97 = vld [vmem:[#allocation9 + $0x2] sm:$0x1]
    %v98 = vld [vmem:[#allocation4] sm:$0xff]
    %v99 = vld [vmem:[#allocation4 + $0x8] sm:$0xff]
    %v100 = vperm.slane %v95, 0
    %vm101 = vcmask 130048
    %v103 = vsel %vm101, %v94, 0
    %105 = vmatpush.msra.mxu0 0.0
    %106 = vmatpush.msra.mxu0 0.0
    %107 = vmatpush.msra.mxu0 0.0
    %108 = vmatpush.msra.mxu0 0.0
    %109 = vmatpush.msra.mxu0 0.0
    %110 = vmatpush.msra.mxu0 0.0
    %111 = vmatpush.msra.mxu0 0.0
    %112 = vmatpush.msra.mxu0 0.0
    %113 = vmatpush.msra.mxu0 0.0
    %114 = vmatpush.msra.mxu0 0.0
    %115 = vmatpush.msra.mxu0 0.0
    %116 = vmatpush.msra.mxu0 0.0
    %117 = vmatpush.msra.mxu0 0.0
    %118 = vmatpush.msra.mxu0 0.0
    %119 = vmatpush.msra.mxu0 %v99
    %120 = vmatpush.msra.mxu0 %v98
    %121 = vmatmul.f32.gmra.mxu0 %v103
    %v122 = vpop.f32.mrf.mxu0
    %v123 = vadd.f32 %v100, %v122
    %124 = vdwg.mxu0
    %v125 = vmax.f32 %v123, 0.0
    %v126 = vld [vmem:[#allocation6] sm:$0xff]
    %v127 = vld [vmem:[#allocation6 + $0x8] sm:$0xff]
    %v128 = vld [vmem:[#allocation6 + $0x10] sm:$0xff]
    %v129 = vld [vmem:[#allocation6 + $0x18] sm:$0xff]
    %v130 = vld [vmem:[#allocation6 + $0x20] sm:$0xff]
    %v131 = vld [vmem:[#allocation6 + $0x28] sm:$0xff]
    %v132 = vld [vmem:[#allocation6 + $0x30] sm:$0xff]
    %v133 = vld [vmem:[#allocation6 + $0x38] sm:$0xff]
    %v134 = vld [vmem:[#allocation6 + $0x40] sm:$0xff]
    %v135 = vld [vmem:[#allocation6 + $0x48] sm:$0xff]
    %v136 = vld [vmem:[#allocation6 + $0x50] sm:$0xff]
    %v137 = vld [vmem:[#allocation6 + $0x58] sm:$0xff]
    %v138 = vld [vmem:[#allocation6 + $0x60] sm:$0xff]
    %v139 = vld [vmem:[#allocation6 + $0x68] sm:$0xff]
    %v140 = vld [vmem:[#allocation6 + $0x70] sm:$0xff]
    %v141 = vld [vmem:[#allocation6 + $0x78] sm:$0xff]
    %v142 = vperm.slane %v96, 0
    %143 = vmatpush.msra.mxu0 %v141
    %144 = vmatpush.msra.mxu0 %v140
    %145 = vmatpush.msra.mxu0 %v139
    %146 = vmatpush.msra.mxu0 %v138
    %147 = vmatpush.msra.mxu0 %v137
    %148 = vmatpush.msra.mxu0 %v136
    %149 = vmatpush.msra.mxu0 %v135
    %150 = vmatpush.msra.mxu0 %v134
    %151 = vmatpush.msra.mxu0 %v133
    %152 = vmatpush.msra.mxu0 %v132
    %153 = vmatpush.msra.mxu0 %v131
    %154 = vmatpush.msra.mxu0 %v130
    %155 = vmatpush.msra.mxu0 %v129
    %156 = vmatpush.msra.mxu0 %v128
    %157 = vmatpush.msra.mxu0 %v127
    %158 = vmatpush.msra.mxu0 %v126
    %159 = vmatmul.f32.gmra.mxu0 %v125
    %v160 = vpop.f32.mrf.mxu0
    %v161 = vadd.f32 %v142, %v160
    %162 = vdwg.mxu0
    %v163 = vmax.f32 %v161, 0.0
    %v164 = vld [vmem:[#allocation7] sm:$0xff]
    %v165 = vld [vmem:[#allocation7 + $0x8] sm:$0xff]
    %v166 = vld [vmem:[#allocation7 + $0x10] sm:$0xff]
    %v167 = vld [vmem:[#allocation7 + $0x18] sm:$0xff]
    %v168 = vld [vmem:[#allocation7 + $0x20] sm:$0xff]
    %v169 = vld [vmem:[#allocation7 + $0x28] sm:$0xff]
    %v170 = vld [vmem:[#allocation7 + $0x30] sm:$0xff]
    %v171 = vld [vmem:[#allocation7 + $0x38] sm:$0xff]
    %v172 = vld [vmem:[#allocation7 + $0x40] sm:$0xff]
    %v173 = vld [vmem:[#allocation7 + $0x48] sm:$0xff]
    %v174 = vld [vmem:[#allocation7 + $0x50] sm:$0xff]
    %v175 = vld [vmem:[#allocation7 + $0x58] sm:$0xff]
    %v176 = vld [vmem:[#allocation7 + $0x60] sm:$0xff]
    %v177 = vld [vmem:[#allocation7 + $0x68] sm:$0xff]
    %v178 = vld [vmem:[#allocation7 + $0x70] sm:$0xff]
    %v179 = vld [vmem:[#allocation7 + $0x78] sm:$0xff]
    %v180 = vperm.slane %v97, 0
    %181 = vmatpush.msra.mxu0 %v179
    %182 = vmatpush.msra.mxu0 %v178
    %183 = vmatpush.msra.mxu0 %v177
    %184 = vmatpush.msra.mxu0 %v176
    %185 = vmatpush.msra.mxu0 %v175
    %186 = vmatpush.msra.mxu0 %v174
    %187 = vmatpush.msra.mxu0 %v173
    %188 = vmatpush.msra.mxu0 %v172
    %189 = vmatpush.msra.mxu0 %v171
    %190 = vmatpush.msra.mxu0 %v170
    %191 = vmatpush.msra.mxu0 %v169
    %192 = vmatpush.msra.mxu0 %v168
    %193 = vmatpush.msra.mxu0 %v167
    %194 = vmatpush.msra.mxu0 %v166
    %195 = vmatpush.msra.mxu0 %v165
    %196 = vmatpush.msra.mxu0 %v164
    %197 = vmatmul.f32.gmra.mxu0 %v163
    %v198 = vpop.f32.mrf.mxu0
    %v199 = vadd.f32 %v180, %v198
    %200 = vdwg.mxu0
    %201 = vst [vmem:[%s5] sm:$0xff] %v199
    // Predicated region
    $region42: #{_forward_impl.1} parent=1 // pred_check
      _
    $region43: #{_forward_impl.1} parent=1 // pred_check_branch
      %203 = sbr.rel (0) target = $region45
    $region44: #{_forward_impl.1} parent=1 // pred_region
      _
    $region45: #{_forward_impl.1} parent=1 // pred_fallthru
      _
    // Predicated region
    $region46: #{_forward_impl.1} parent=1 // pred_check
      _
    $region47: #{_forward_impl.1} parent=1 // pred_check_branch
      %205 = sbr.rel (0) target = $region49
    $region48: #{_forward_impl.1} parent=1 // pred_region
      _
    $region49: #{_forward_impl.1} parent=1 // pred_fallthru
      _
    %206 = vsyncpa [#allocation3], 1
    %207 = vsyncpa [#allocation5], 1
    %208 = vsyncpa [#allocation8], 1

</llo_original>
